<compile_context>
chip_gen: v7x
topology: tpu7x:2x2x1
jax: 0.10.0
libtpu: 0.0.40
codegen_flags: <defaults>
</compile_context>

<pallas_src>
import functools

import jax
import jax.numpy as jnp
from jax.experimental import pallas as pl
from jax.experimental.pallas import tpu as pltpu

IN_FEATURES = 784                 # 1 * 28 * 28
IN_PAD = 896                      # 7 * 128  (lane-aligned K)
HIDDEN = 256
NUM_CLASSES = 10
OUT_PAD = 128                     # lane-dense output / full MXU output columns
DROP_P = 0.2
NEG_BIG = -1e30                   # bias for padded logit columns

# Batch tile.  2048 keeps 2x double-buffered bf16 x tiles + weights + output
# well under ~16 MiB, safe on v7x's 64 MiB VMEM (v5e/v6e could go 4096-8192).
TILE_B = 2048


def _round_up(x, m):
    return (x + m - 1) // m * m


def classifier_kernel(*refs, training: bool):
    if training:
        x_ref, m_ref, w1_ref, b1_ref, w2_ref, b2_ref, o_ref = refs
    else:
        x_ref, w1_ref, b1_ref, w2_ref, b2_ref, o_ref = refs
        m_ref = None

    # ---- fc1 + ReLU (bf16 MXU matmul, f32 accumulate) ----
    x = x_ref[...]                                              # (TB, 896) bf16
    h = jnp.dot(x, w1_ref[...], preferred_element_type=jnp.float32)
    h = h + b1_ref[...]                                         # (1, 256) f32
    h = jnp.maximum(h, 0.0)

    # ---- Dropout(p=0.2), inverted-dropout; mask precomputed in the wrapper ----
    if training:
        h = h * m_ref[...].astype(jnp.float32)                  # 0 or 1/(1-p)

    # ---- fc2 (class dim padded to 128; pad columns get -1e30 bias) ----
    z = jnp.dot(h.astype(w2_ref.dtype), w2_ref[...],
                preferred_element_type=jnp.float32)
    z = z + b2_ref[...]                                         # (TB, 128) f32

    # ---- log_softmax over dim=1 (numerically stable; pad cols -> exp()==0) ----
    m = jnp.max(z, axis=1, keepdims=True)
    s = z - m
    lse = jnp.log(jnp.sum(jnp.exp(s), axis=1, keepdims=True))
    o_ref[...] = s - lse


def classifier_forward(x_nchw, params, *, training: bool = False, rng_key=None):
    """x_nchw: (B, 1, 28, 28) float32 -> log-probs (B, 10) float32."""
    w1, b1, w2, b2 = params
    B = x_nchw.shape[0]
    x = x_nchw.reshape(B, -1).astype(jnp.float32)               # (B, 784)

    # Pad features 784 -> 896 (zero columns; matching zero w1 rows).
    x = jnp.pad(x, ((0, 0), (0, IN_PAD - IN_FEATURES)))

    # Pad / tile the batch.
    b8 = _round_up(max(B, 8), 8)
    tb = min(TILE_B, b8)
    b_pad = _round_up(b8, tb)
    x = jnp.pad(x, ((0, b_pad - B), (0, 0))).astype(jnp.bfloat16)

    # Weights: pre-transposed, padded, bf16.  Biases stay f32.
    w1t = jnp.zeros((IN_PAD, HIDDEN), jnp.float32)
    w1t = w1t.at[:IN_FEATURES, :].set(jnp.asarray(w1, jnp.float32).T)
    w1t = w1t.astype(jnp.bfloat16)                              # (896, 256)
    b1r = jnp.asarray(b1, jnp.float32).reshape(1, HIDDEN)

    w2t = jnp.zeros((HIDDEN, OUT_PAD), jnp.float32)
    w2t = w2t.at[:, :NUM_CLASSES].set(jnp.asarray(w2, jnp.float32).T)
    w2t = w2t.astype(jnp.bfloat16)                              # (256, 128)
    b2r = jnp.full((1, OUT_PAD), NEG_BIG, jnp.float32)
    b2r = b2r.at[0, :NUM_CLASSES].set(jnp.asarray(b2, jnp.float32))

    inputs = [x]
    in_specs = [pl.BlockSpec((tb, IN_PAD), lambda i: (i, 0))]
    if training:
        # TODO(synk): dropout mask uses jax.random, not torch's RNG stream
        # (statistics match, p=0.2; bits do not).
        if rng_key is None:
            rng_key = jax.random.PRNGKey(0)
        keep = jax.random.bernoulli(rng_key, 1.0 - DROP_P, (b_pad, HIDDEN))
        mask = (keep.astype(jnp.float32) / (1.0 - DROP_P)).astype(jnp.bfloat16)
        inputs.append(mask)
        in_specs.append(pl.BlockSpec((tb, HIDDEN), lambda i: (i, 0)))
    inputs += [w1t, b1r, w2t, b2r]
    in_specs += [
        pl.BlockSpec((IN_PAD, HIDDEN), lambda i: (0, 0)),        # w1^T (resident)
        pl.BlockSpec((1, HIDDEN), lambda i: (0, 0)),             # b1
        pl.BlockSpec((HIDDEN, OUT_PAD), lambda i: (0, 0)),       # w2^T (resident)
        pl.BlockSpec((1, OUT_PAD), lambda i: (0, 0)),            # b2
    ]

    flops = 2 * b_pad * (IN_PAD * HIDDEN + HIDDEN * OUT_PAD)
    bytes_accessed = (x.size * 2 + w1t.size * 2 + w2t.size * 2
                      + (b1r.size + b2r.size) * 4
                      + b_pad * OUT_PAD * 4
                      + (b_pad * HIDDEN * 2 if training else 0))

    out = pl.pallas_call(
        functools.partial(classifier_kernel, training=training),
        out_shape=jax.ShapeDtypeStruct((b_pad, OUT_PAD), jnp.float32),
        grid=(b_pad // tb,),
        in_specs=in_specs,
        out_specs=pl.BlockSpec((tb, OUT_PAD), lambda i: (i, 0)),
        compiler_params=pltpu.CompilerParams(
            dimension_semantics=("parallel",),
            vmem_limit_bytes=48 << 20),
        cost_estimate=pl.CostEstimate(
            flops=flops,
            transcendentals=b_pad * OUT_PAD,
            bytes_accessed=bytes_accessed),
    )(*inputs)
    return out[:B, :NUM_CLASSES]


def init_params(key):
    """Deterministic init matching nn.Linear default: U(-1/sqrt(fan_in), +)."""
    k1, k2, k3, k4 = jax.random.split(key, 4)
    bound1 = 1.0 / jnp.sqrt(IN_FEATURES)
    bound2 = 1.0 / jnp.sqrt(HIDDEN)
    w1 = jax.random.uniform(k1, (HIDDEN, IN_FEATURES), jnp.float32,
                            -bound1, bound1)
    b1 = jax.random.uniform(k2, (HIDDEN,), jnp.float32, -bound1, bound1)
    w2 = jax.random.uniform(k3, (NUM_CLASSES, HIDDEN), jnp.float32,
                            -bound2, bound2)
    b2 = jax.random.uniform(k4, (NUM_CLASSES,), jnp.float32, -bound2, bound2)
    return w1, b1, w2, b2


def reference_forward_eval(x_nchw, params):
    """Pure-JAX reference mirroring the kernel's bf16-in / f32-accumulate math
    (eval mode: dropout = identity)."""
    w1, b1, w2, b2 = params
    x = x_nchw.reshape(x_nchw.shape[0], -1).astype(jnp.bfloat16)
    w1b = jnp.asarray(w1, jnp.float32).astype(jnp.bfloat16)
    w2b = jnp.asarray(w2, jnp.float32).astype(jnp.bfloat16)
    h = jnp.dot(x, w1b.T, preferred_element_type=jnp.float32) + b1
    h = jnp.maximum(h, 0.0)
    z = jnp.dot(h.astype(jnp.bfloat16), w2b.T,
                preferred_element_type=jnp.float32) + b2
    return jax.nn.log_softmax(z, axis=1)


if __name__ == "__main__":
    key = jax.random.PRNGKey(0)
    k_params, k_x, k_drop = jax.random.split(key, 3)

    params = init_params(k_params)
    # MNIST-shaped NCHW input, small batch.
    x = jax.random.normal(k_x, (8, 1, 28, 28), dtype=jnp.float32)

    # Eval-mode forward (deterministic; dropout is identity, like .eval()).
    out = jax.block_until_ready(classifier_forward(x, params, training=False))
    ref = reference_forward_eval(x, params)
    assert out.shape == (8, NUM_CLASSES)
    assert jnp.allclose(out, ref, atol=1e-3, rtol=1e-3), "mismatch vs reference"

    # Training path (precomputed inverted-dropout mask, p=0.2).
    out_train = jax.block_until_ready(
        classifier_forward(x, params, training=True, rng_key=k_drop))
    assert out_train.shape == (8, NUM_CLASSES)
    assert bool(jnp.all(jnp.isfinite(out_train)))

    print("KERNEL_OK")
</pallas_src>

<mosaic_0001>
module attributes {stable_mosaic.version = 11 : i64} {
  func.func @classifier_kernel(%arg0: i32, %arg1: memref<8x896xbf16, #tpu.memory_space<vmem>>, %arg2: memref<896x256xbf16, #tpu.memory_space<vmem>>, %arg3: memref<1x256xf32, #tpu.memory_space<vmem>>, %arg4: memref<256x128xbf16, #tpu.memory_space<vmem>>, %arg5: memref<1x128xf32, #tpu.memory_space<vmem>>, %arg6: memref<8x128xf32, #tpu.memory_space<vmem>>) attributes {dimension_semantics = [#tpu.dimension_semantics<parallel>], iteration_bounds = array<i64: 1>, scalar_prefetch = 0 : i64, scratch_operands = 0 : i64, tpu.core_type = #tpu.core_type<tc>, window_params = [{transform_indices = @transform_0, window_bounds = array<i64: 8, 896>}, {pipeline_mode = #tpu.pipeline_mode<synchronous>, transform_indices = @transform_1, window_bounds = array<i64: 896, 256>}, {pipeline_mode = #tpu.pipeline_mode<synchronous>, transform_indices = @transform_2, window_bounds = array<i64: 1, 256>}, {pipeline_mode = #tpu.pipeline_mode<synchronous>, transform_indices = @transform_3, window_bounds = array<i64: 256, 128>}, {pipeline_mode = #tpu.pipeline_mode<synchronous>, transform_indices = @transform_4, window_bounds = array<i64: 1, 128>}, {transform_indices = @transform_5, window_bounds = array<i64: 8, 128>}]} {
    %c0 = arith.constant 0 : index
    %c0_0 = arith.constant 0 : index
    %0 = vector.load %arg1[%c0, %c0_0] : memref<8x896xbf16, #tpu.memory_space<vmem>>, vector<8x896xbf16>
    %c0_1 = arith.constant 0 : index
    %c0_2 = arith.constant 0 : index
    %1 = vector.load %arg2[%c0_1, %c0_2] : memref<896x256xbf16, #tpu.memory_space<vmem>>, vector<896x256xbf16>
    %cst = arith.constant dense<0.000000e+00> : vector<8x256xf32>
    %2 = tpu.matmul %0, %1, %cst {dimension_numbers = #tpu.dot_dimension_numbers<[1], [0], [0], [1], [0, 0, 1, 1], [], []>} : vector<8x896xbf16>, vector<896x256xbf16>, vector<8x256xf32> -> vector<8x256xf32>
    %c0_3 = arith.constant 0 : index
    %c0_4 = arith.constant 0 : index
    %3 = vector.load %arg3[%c0_3, %c0_4] : memref<1x256xf32, #tpu.memory_space<vmem>>, vector<1x256xf32>
    %4 = vector.broadcast %3 : vector<1x256xf32> to vector<8x256xf32>
    %5 = arith.addf %2, %4 : vector<8x256xf32>
    %cst_5 = arith.constant 0.000000e+00 : f32
    %6 = vector.broadcast %cst_5 : f32 to vector<8x256xf32>
    %7 = arith.maximumf %5, %6 : vector<8x256xf32>
    %8 = arith.truncf %7 : vector<8x256xf32> to vector<8x256xbf16>
    %c0_6 = arith.constant 0 : index
    %c0_7 = arith.constant 0 : index
    %9 = vector.load %arg4[%c0_6, %c0_7] : memref<256x128xbf16, #tpu.memory_space<vmem>>, vector<256x128xbf16>
    %cst_8 = arith.constant dense<0.000000e+00> : vector<8x128xf32>
    %10 = tpu.matmul %8, %9, %cst_8 {dimension_numbers = #tpu.dot_dimension_numbers<[1], [0], [0], [1], [0, 0, 1, 1], [], []>} : vector<8x256xbf16>, vector<256x128xbf16>, vector<8x128xf32> -> vector<8x128xf32>
    %c0_9 = arith.constant 0 : index
    %c0_10 = arith.constant 0 : index
    %11 = vector.load %arg5[%c0_9, %c0_10] : memref<1x128xf32, #tpu.memory_space<vmem>>, vector<1x128xf32>
    %12 = vector.broadcast %11 : vector<1x128xf32> to vector<8x128xf32>
    %13 = arith.addf %10, %12 : vector<8x128xf32>
    %cst_11 = arith.constant dense<0xFF800000> : vector<8xf32>
    %14 = vector.multi_reduction <maximumf>, %13, %cst_11 [1] : vector<8x128xf32> to vector<8xf32>
    %15 = vector.shape_cast %14 : vector<8xf32> to vector<8x1xf32>
    %16 = vector.broadcast %15 : vector<8x1xf32> to vector<8x128xf32>
    %17 = arith.subf %13, %16 : vector<8x128xf32>
    %18 = math.exp %17 : vector<8x128xf32>
    %cst_12 = arith.constant dense<0.000000e+00> : vector<8xf32>
    %19 = vector.multi_reduction <add>, %18, %cst_12 [1] : vector<8x128xf32> to vector<8xf32>
    %20 = vector.shape_cast %19 : vector<8xf32> to vector<8x1xf32>
    %21 = math.log %20 : vector<8x1xf32>
    %22 = vector.broadcast %21 : vector<8x1xf32> to vector<8x128xf32>
    %23 = arith.subf %17, %22 : vector<8x128xf32>
    %c0_13 = arith.constant 0 : index
    %c0_14 = arith.constant 0 : index
    %24 = vector.load %arg6[%c0_13, %c0_14] : memref<8x128xf32, #tpu.memory_space<vmem>>, vector<8x128xf32>
    tpu.vector_store %arg6[%c0_13, %c0_14], %23 {strides = array<i32>} : memref<8x128xf32, #tpu.memory_space<vmem>>, vector<8x128xf32>,
    return
  }
  func.func @transform_0(%arg0: i32) -> (i32, i32) {
    %c0_i32 = arith.constant 0 : i32
    %c0_i32_0 = arith.constant 0 : i32
    return %arg0, %c0_i32 : i32, i32
  }
  func.func @transform_1(%arg0: i32) -> (i32, i32) {
    %c0_i32 = arith.constant 0 : i32
    %c0_i32_0 = arith.constant 0 : i32
    %c0_i32_1 = arith.constant 0 : i32
    return %c0_i32, %c0_i32_0 : i32, i32
  }
  func.func @transform_2(%arg0: i32) -> (i32, i32) {
    %c0_i32 = arith.constant 0 : i32
    %c0_i32_0 = arith.constant 0 : i32
    %c0_i32_1 = arith.constant 0 : i32
    return %c0_i32, %c0_i32_0 : i32, i32
  }
  func.func @transform_3(%arg0: i32) -> (i32, i32) {
    %c0_i32 = arith.constant 0 : i32
    %c0_i32_0 = arith.constant 0 : i32
    %c0_i32_1 = arith.constant 0 : i32
    return %c0_i32, %c0_i32_0 : i32, i32
  }
  func.func @transform_4(%arg0: i32) -> (i32, i32) {
    %c0_i32 = arith.constant 0 : i32
    %c0_i32_0 = arith.constant 0 : i32
    %c0_i32_1 = arith.constant 0 : i32
    return %c0_i32, %c0_i32_0 : i32, i32
  }
  func.func @transform_5(%arg0: i32) -> (i32, i32) {
    %c0_i32 = arith.constant 0 : i32
    %c0_i32_0 = arith.constant 0 : i32
    return %arg0, %c0_i32 : i32, i32
  }
}

</mosaic_0001>

<llo_original>
// kernel: tpu_custom_call.1
$region0: #{tpu_custom_call.1}
  #allocation0 [shape = 'u32[]', space=smem, size = 0x4, offset = 0x4, fixed_abs, tag = 'smem constant byte address 0x4 - core index']
  #allocation1 [shape = 'u32[144,128]{1,0:T(1,128)}', space=vmem, size = 0x12000, scoped, tag = 'internal scratch']
  %s0 = inlined_call_operand.hbm [shape: bf16[8,896], index: 0, kind: input, shape index: {}]
  %s1 = inlined_call_operand.hbm [shape: bf16[896,256], index: 1, kind: input, shape index: {}]
  %s2 = inlined_call_operand.vmem [shape: f32[1,256], index: 2, kind: input, shape index: {}]
  %s3 = inlined_call_operand.hbm [shape: bf16[256,128], index: 3, kind: input, shape index: {}]
  %s4 = inlined_call_operand.vmem [shape: f32[1,128], index: 4, kind: input, shape index: {}]
  %s5 = inlined_call_operand.hbm [shape: f32[8,128], index: 5, kind: output, shape index: {}]
  %s6 = sld [smem:[#allocation0]]
  $region42: #{tpu_custom_call.1} parent=0
    _
  %s8 = ssub.s32 1, %s6
  %s9 = scalar_select 0, %s8, %s6
  $region1: #{tpu_custom_call.1} parent=0
    #allocation2 [shape = 'u8[14336]{0}', space=vmem, size = 0x3800, scoped, tag = 'input window, operand 0, single buffered']
    #allocation3 [shape = 's32[1]{0}', space=sflag, size = 0x4, scoped, tag = 'scoped memory for tpu_custom_call.1']
    #allocation4 [shape = 's32[1]{0}', space=sflag, size = 0x4, scoped, tag = 'scoped memory for tpu_custom_call.1']
    #allocation5 [shape = 'u8[458752]{0}', space=vmem, size = 0x70000, scoped, tag = 'input window, operand 1, single buffered']
    #allocation6 [shape = 's32[1]{0}', space=sflag, size = 0x4, scoped, tag = 'scoped memory for tpu_custom_call.1']
    #allocation7 [shape = 'u8[65536]{0}', space=vmem, size = 0x10000, scoped, tag = 'input window, operand 3, single buffered']
    #allocation8 [shape = 'u8[4096]{0}', space=vmem, size = 0x1000, scoped, tag = 'output window, operand 0, single buffered']
    %10 = vsyncpa [#allocation3], 0
    %11 = vsyncpa [#allocation6], 0
    %12 = vsyncpa [#allocation4], 0
    // Predicated region
    $region2: #{tpu_custom_call.1} parent=1 // pred_check
      _
    $region3: #{tpu_custom_call.1} parent=1 // pred_check_branch
      %14 = sbr.rel (0) target = $region5
    $region4: #{tpu_custom_call.1} parent=1 // pred_region
      %s16 = ssub.s32 448, 448
      %17 = vsyncadd [#allocation3], %s16
      %s19 = sshll.u32 [#allocation2], 4
      %s20 = int_to_ptr.vmem [resolvable:$true] %s19
      %22 = dma.hbm_to_vmem [thread:$0]  %s0, 448, %s20, [#allocation3]
    $region5: #{tpu_custom_call.1} parent=1 // pred_fallthru
      _
    // Predicated region
    $region6: #{tpu_custom_call.1} parent=1 // pred_check
      _
    $region7: #{tpu_custom_call.1} parent=1 // pred_check_branch
      %24 = sbr.rel (0) target = $region9
    $region8: #{tpu_custom_call.1} parent=1 // pred_region
      %s26 = ssub.s32 14336, 14336
      %27 = vsyncadd [#allocation6], %s26
      %s28 = sshll.u32 [#allocation5], 4
      %s29 = int_to_ptr.vmem [resolvable:$true] %s28
      %34 = dma.hbm_to_vmem [thread:$0]  %s1, 14336, %s29, [#allocation6], 128, 128, 8
    $region9: #{tpu_custom_call.1} parent=1 // pred_fallthru
      _
    // Predicated region
    $region10: #{tpu_custom_call.1} parent=1 // pred_check
      _
    $region11: #{tpu_custom_call.1} parent=1 // pred_check_branch
      %36 = sbr.rel (0) target = $region13
    $region12: #{tpu_custom_call.1} parent=1 // pred_region
      _
    $region13: #{tpu_custom_call.1} parent=1 // pred_fallthru
      _
    // Predicated region
    $region14: #{tpu_custom_call.1} parent=1 // pred_check
      _
    $region15: #{tpu_custom_call.1} parent=1 // pred_check_branch
      %38 = sbr.rel (0) target = $region17
    $region16: #{tpu_custom_call.1} parent=1 // pred_region
      %s40 = ssub.s32 2048, 2048
      %41 = vsyncadd [#allocation6], %s40
      %s42 = sshll.u32 [#allocation7], 4
      %s43 = int_to_ptr.vmem [resolvable:$true] %s42
      %48 = dma.hbm_to_vmem [thread:$0]  %s3, 2048, %s43, [#allocation6], 64, 64, 4
    $region17: #{tpu_custom_call.1} parent=1 // pred_fallthru
      _
    // Predicated region
    $region18: #{tpu_custom_call.1} parent=1 // pred_check
      _
    $region19: #{tpu_custom_call.1} parent=1 // pred_check_branch
      %50 = sbr.rel (0) target = $region21
    $region20: #{tpu_custom_call.1} parent=1 // pred_region
      _
    $region21: #{tpu_custom_call.1} parent=1 // pred_fallthru
      _
    // Predicated region
    $region22: #{tpu_custom_call.1} parent=1 // pred_check
      _
    $region23: #{tpu_custom_call.1} parent=1 // pred_check_branch
      %52 = sbr.rel (0) target = $region25
    $region24: #{tpu_custom_call.1} parent=1 // pred_region
      %53 = dma.done [#allocation3], 448
    $region25: #{tpu_custom_call.1} parent=1 // pred_fallthru
      _
    // Predicated region
    $region26: #{tpu_custom_call.1} parent=1 // pred_check
      _
    $region27: #{tpu_custom_call.1} parent=1 // pred_check_branch
      %55 = sbr.rel (0) target = $region29
    $region28: #{tpu_custom_call.1} parent=1 // pred_region
      %56 = dma.done [#allocation6], 14336
    $region29: #{tpu_custom_call.1} parent=1 // pred_fallthru
      _
    // Predicated region
    $region30: #{tpu_custom_call.1} parent=1 // pred_check
      _
    $region31: #{tpu_custom_call.1} parent=1 // pred_check_branch
      %58 = sbr.rel (0) target = $region33
    $region32: #{tpu_custom_call.1} parent=1 // pred_region
      %59 = dma.done [#allocation6], 2048
    $region33: #{tpu_custom_call.1} parent=1 // pred_fallthru
      _
    %v61 = vld [vmem:[#allocation2] sm:$0xff]
    %v62 = vld [vmem:[#allocation2 + $0x8] sm:$0xff]
    %v63 = vld [vmem:[#allocation2 + $0x10] sm:$0xff]
    %v64 = vld [vmem:[#allocation2 + $0x18] sm:$0xf]
    %v65 = vld [vmem:[#allocation5] sm:$0xff]
    %v66 = vld [vmem:[#allocation5 + $0x8] sm:$0xff]
    %v67 = vld [vmem:[#allocation5 + $0x10] sm:$0xff]
    %v68 = vld [vmem:[#allocation5 + $0x18] sm:$0xff]
    %v69 = vld [vmem:[#allocation5 + $0x20] sm:$0xff]
    %v70 = vld [vmem:[#allocation5 + $0x28] sm:$0xff]
    %v71 = vld [vmem:[#allocation5 + $0x30] sm:$0xff]
    %v72 = vld [vmem:[#allocation5 + $0x38] sm:$0xff]
    %v73 = vld [vmem:[#allocation5 + $0x40] sm:$0xff]
    %v74 = vld [vmem:[#allocation5 + $0x48] sm:$0xff]
    %v75 = vld [vmem:[#allocation5 + $0x50] sm:$0xff]
    %v76 = vld [vmem:[#allocation5 + $0x58] sm:$0xff]
    %v77 = vld [vmem:[#allocation5 + $0x60] sm:$0xff]
    %v78 = vld [vmem:[#allocation5 + $0x68] sm:$0xff]
    %v79 = vld [vmem:[#allocation5 + $0x70] sm:$0xff]
    %v80 = vld [vmem:[#allocation5 + $0x78] sm:$0xff]
    %v81 = vld [vmem:[#allocation5 + $0x80] sm:$0xff]
    %v82 = vld [vmem:[#allocation5 + $0x88] sm:$0xff]
    %v83 = vld [vmem:[#allocation5 + $0x90] sm:$0xff]
    %v84 = vld [vmem:[#allocation5 + $0x98] sm:$0xff]
    %v85 = vld [vmem:[#allocation5 + $0xa0] sm:$0xff]
    %v86 = vld [vmem:[#allocation5 + $0xa8] sm:$0xff]
    %v87 = vld [vmem:[#allocation5 + $0xb0] sm:$0xff]
    %v88 = vld [vmem:[#allocation5 + $0xb8] sm:$0xff]
    %v89 = vld [vmem:[#allocation5 + $0xc0] sm:$0xff]
    %v90 = vld [vmem:[#allocation5 + $0xc8] sm:$0xff]
    %v91 = vld [vmem:[#allocation5 + $0xd0] sm:$0xff]
    %v92 = vld [vmem:[#allocation5 + $0xd8] sm:$0xff]
    %v93 = vld [vmem:[#allocation5 + $0xe0] sm:$0xff]
    %v94 = vld [vmem:[#allocation5 + $0xe8] sm:$0xff]
    %v95 = vld [vmem:[#allocation5 + $0xf0] sm:$0xff]
    %v96 = vld [vmem:[#allocation5 + $0xf8] sm:$0xff]
    %v97 = vld [vmem:[#allocation5 + $0x100] sm:$0xff]
    %v98 = vld [vmem:[#allocation5 + $0x108] sm:$0xff]
    %v99 = vld [vmem:[#allocation5 + $0x110] sm:$0xff]
    %v100 = vld [vmem:[#allocation5 + $0x118] sm:$0xff]
    %v101 = vld [vmem:[#allocation5 + $0x120] sm:$0xff]
    %v102 = vld [vmem:[#allocation5 + $0x128] sm:$0xff]
    %v103 = vld [vmem:[#allocation5 + $0x130] sm:$0xff]
    %v104 = vld [vmem:[#allocation5 + $0x138] sm:$0xff]
    %v105 = vld [vmem:[#allocation5 + $0x140] sm:$0xff]
    %v106 = vld [vmem:[#allocation5 + $0x148] sm:$0xff]
    %v107 = vld [vmem:[#allocation5 + $0x150] sm:$0xff]
    %v108 = vld [vmem:[#allocation5 + $0x158] sm:$0xff]
    %v109 = vld [vmem:[#allocation5 + $0x160] sm:$0xff]
    %v110 = vld [vmem:[#allocation5 + $0x168] sm:$0xff]
    %v111 = vld [vmem:[#allocation5 + $0x170] sm:$0xff]
    %v112 = vld [vmem:[#allocation5 + $0x178] sm:$0xff]
    %v113 = vld [vmem:[#allocation5 + $0x180] sm:$0xff]
    %v114 = vld [vmem:[#allocation5 + $0x188] sm:$0xff]
    %v115 = vld [vmem:[#allocation5 + $0x190] sm:$0xff]
    %v116 = vld [vmem:[#allocation5 + $0x198] sm:$0xff]
    %v117 = vld [vmem:[#allocation5 + $0x1a0] sm:$0xff]
    %v118 = vld [vmem:[#allocation5 + $0x1a8] sm:$0xff]
    %v119 = vld [vmem:[#allocation5 + $0x1b0] sm:$0xff]
    %v120 = vld [vmem:[#allocation5 + $0x1b8] sm:$0xff]
    %v121 = vld [vmem:[#allocation5 + $0x1c0] sm:$0xff]
    %v122 = vld [vmem:[#allocation5 + $0x1c8] sm:$0xff]
    %v123 = vld [vmem:[#allocation5 + $0x1d0] sm:$0xff]
    %v124 = vld [vmem:[#allocation5 + $0x1d8] sm:$0xff]
    %v125 = vld [vmem:[#allocation5 + $0x1e0] sm:$0xff]
    %v126 = vld [vmem:[#allocation5 + $0x1e8] sm:$0xff]
    %v127 = vld [vmem:[#allocation5 + $0x1f0] sm:$0xff]
    %v128 = vld [vmem:[#allocation5 + $0x1f8] sm:$0xff]
    %v129 = vld [vmem:[#allocation5 + $0x200] sm:$0xff]
    %v130 = vld [vmem:[#allocation5 + $0x208] sm:$0xff]
    %v131 = vld [vmem:[#allocation5 + $0x210] sm:$0xff]
    %v132 = vld [vmem:[#allocation5 + $0x218] sm:$0xff]
    %v133 = vld [vmem:[#allocation5 + $0x220] sm:$0xff]
    %v134 = vld [vmem:[#allocation5 + $0x228] sm:$0xff]
    %v135 = vld [vmem:[#allocation5 + $0x230] sm:$0xff]
    %v136 = vld [vmem:[#allocation5 + $0x238] sm:$0xff]
    %v137 = vld [vmem:[#allocation5 + $0x240] sm:$0xff]
    %v138 = vld [vmem:[#allocation5 + $0x248] sm:$0xff]
    %v139 = vld [vmem:[#allocation5 + $0x250] sm:$0xff]
    %v140 = vld [vmem:[#allocation5 + $0x258] sm:$0xff]
    %v141 = vld [vmem:[#allocation5 + $0x260] sm:$0xff]
    %v142 = vld [vmem:[#allocation5 + $0x268] sm:$0xff]
    %v143 = vld [vmem:[#allocation5 + $0x270] sm:$0xff]
    %v144 = vld [vmem:[#allocation5 + $0x278] sm:$0xff]
    %v145 = vld [vmem:[#allocation5 + $0x280] sm:$0xff]
    %v146 = vld [vmem:[#allocation5 + $0x288] sm:$0xff]
    %v147 = vld [vmem:[#allocation5 + $0x290] sm:$0xff]
    %v148 = vld [vmem:[#allocation5 + $0x298] sm:$0xff]
    %v149 = vld [vmem:[#allocation5 + $0x2a0] sm:$0xff]
    %v150 = vld [vmem:[#allocation5 + $0x2a8] sm:$0xff]
    %v151 = vld [vmem:[#allocation5 + $0x2b0] sm:$0xff]
    %v152 = vld [vmem:[#allocation5 + $0x2b8] sm:$0xff]
    %v153 = vld [vmem:[#allocation5 + $0x2c0] sm:$0xff]
    %v154 = vld [vmem:[#allocation5 + $0x2c8] sm:$0xff]
    %v155 = vld [vmem:[#allocation5 + $0x2d0] sm:$0xff]
    %v156 = vld [vmem:[#allocation5 + $0x2d8] sm:$0xff]
    %v157 = vld [vmem:[#allocation5 + $0x2e0] sm:$0xff]
    %v158 = vld [vmem:[#allocation5 + $0x2e8] sm:$0xff]
    %v159 = vld [vmem:[#allocation5 + $0x2f0] sm:$0xff]
    %v160 = vld [vmem:[#allocation5 + $0x2f8] sm:$0xff]
    %v161 = vld [vmem:[#allocation5 + $0x300] sm:$0xff]
    %v162 = vld [vmem:[#allocation5 + $0x308] sm:$0xff]
    %v163 = vld [vmem:[#allocation5 + $0x310] sm:$0xff]
    %v164 = vld [vmem:[#allocation5 + $0x318] sm:$0xff]
    %v165 = vld [vmem:[#allocation5 + $0x320] sm:$0xff]
    %v166 = vld [vmem:[#allocation5 + $0x328] sm:$0xff]
    %v167 = vld [vmem:[#allocation5 + $0x330] sm:$0xff]
    %v168 = vld [vmem:[#allocation5 + $0x338] sm:$0xff]
    %v169 = vld [vmem:[#allocation5 + $0x340] sm:$0xff]
    %v170 = vld [vmem:[#allocation5 + $0x348] sm:$0xff]
    %v171 = vld [vmem:[#allocation5 + $0x350] sm:$0xff]
    %v172 = vld [vmem:[#allocation5 + $0x358] sm:$0xff]
    %v173 = vld [vmem:[#allocation5 + $0x360] sm:$0xff]
    %v174 = vld [vmem:[#allocation5 + $0x368] sm:$0xff]
    %v175 = vld [vmem:[#allocation5 + $0x370] sm:$0xff]
    %v176 = vld [vmem:[#allocation5 + $0x378] sm:$0xff]
    %v177 = vld [vmem:[%s2] sm:$0x3]
    %v179 = vlaneseq
    %v180 = vshrl.u32 %v179, 7
    %v181 = vsub.s32 0, %v180
    %v182 = vrot.slane %v177, %v181
    %v183 = vlaneseq
    %v184 = vshrl.u32 %v183, 7
    %v185 = vsub.s32 1, %v184
    %v186 = vrot.slane %v177, %v185
    %v193 = vunpack.c.l.b16 %v61
    %v194 = vunpack.c.h.b16 %v61
    %v195 = vunpack.c.l.b16 %v62
    %v196 = vunpack.c.h.b16 %v62
    %v197 = vunpack.c.l.b16 %v63
    %v198 = vunpack.c.h.b16 %v63
    %v199 = vunpack.c.l.b16 %v64
    %v200 = vpack.c.b16 %v193, %v193
    %v201 = vpack.c.b16 %v194, %v194
    %v202 = vpack.c.b16 %v195, %v195
    %v203 = vpack.c.b16 %v196, %v196
    %v204 = vpack.c.b16 %v197, %v197
    %v205 = vpack.c.b16 %v198, %v198
    %v206 = vpack.c.b16 %v199, %v199
    %v326 = vunpack.c.l.b16 %v65
    %v327 = vunpack.c.h.b16 %v65
    %v328 = vunpack.c.l.b16 %v66
    %v329 = vunpack.c.h.b16 %v66
    %v330 = vunpack.c.l.b16 %v67
    %v331 = vunpack.c.h.b16 %v67
    %v332 = vunpack.c.l.b16 %v68
    %v333 = vunpack.c.h.b16 %v68
    %v334 = vunpack.c.l.b16 %v69
    %v335 = vunpack.c.h.b16 %v69
    %v336 = vunpack.c.l.b16 %v70
    %v337 = vunpack.c.h.b16 %v70
    %v338 = vunpack.c.l.b16 %v71
    %v339 = vunpack.c.h.b16 %v71
    %v340 = vunpack.c.l.b16 %v72
    %v341 = vunpack.c.h.b16 %v72
    %v342 = vunpack.c.l.b16 %v73
    %v343 = vunpack.c.h.b16 %v73
    %v344 = vunpack.c.l.b16 %v74
    %v345 = vunpack.c.h.b16 %v74
    %v346 = vunpack.c.l.b16 %v75
    %v347 = vunpack.c.h.b16 %v75
    %v348 = vunpack.c.l.b16 %v76
    %v349 = vunpack.c.h.b16 %v76
    %v350 = vunpack.c.l.b16 %v77
    %v351 = vunpack.c.h.b16 %v77
    %v352 = vunpack.c.l.b16 %v78
    %v353 = vunpack.c.h.b16 %v78
    %v354 = vunpack.c.l.b16 %v79
    %v355 = vunpack.c.h.b16 %v79
    %v356 = vunpack.c.l.b16 %v80
    %v357 = vunpack.c.h.b16 %v80
    %v358 = vunpack.c.l.b16 %v81
    %v359 = vunpack.c.h.b16 %v81
    %v360 = vunpack.c.l.b16 %v82
    %v361 = vunpack.c.h.b16 %v82
    %v362 = vunpack.c.l.b16 %v83
    %v363 = vunpack.c.h.b16 %v83
    %v364 = vunpack.c.l.b16 %v84
    %v365 = vunpack.c.h.b16 %v84
    %v366 = vunpack.c.l.b16 %v85
    %v367 = vunpack.c.h.b16 %v85
    %v368 = vunpack.c.l.b16 %v86
    %v369 = vunpack.c.h.b16 %v86
    %v370 = vunpack.c.l.b16 %v87
    %v371 = vunpack.c.h.b16 %v87
    %v372 = vunpack.c.l.b16 %v88
    %v373 = vunpack.c.h.b16 %v88
    %v374 = vunpack.c.l.b16 %v89
    %v375 = vunpack.c.h.b16 %v89
    %v376 = vunpack.c.l.b16 %v90
    %v377 = vunpack.c.h.b16 %v90
    %v378 = vunpack.c.l.b16 %v91
    %v379 = vunpack.c.h.b16 %v91
    %v380 = vunpack.c.l.b16 %v92
    %v381 = vunpack.c.h.b16 %v92
    %v382 = vunpack.c.l.b16 %v93
    %v383 = vunpack.c.h.b16 %v93
    %v384 = vunpack.c.l.b16 %v94
    %v385 = vunpack.c.h.b16 %v94
    %v386 = vunpack.c.l.b16 %v95
    %v387 = vunpack.c.h.b16 %v95
    %v388 = vunpack.c.l.b16 %v96
    %v389 = vunpack.c.h.b16 %v96
    %v390 = vunpack.c.l.b16 %v97
    %v391 = vunpack.c.h.b16 %v97
    %v392 = vunpack.c.l.b16 %v98
    %v393 = vunpack.c.h.b16 %v98
    %v394 = vunpack.c.l.b16 %v99
    %v395 = vunpack.c.h.b16 %v99
    %v396 = vunpack.c.l.b16 %v100
    %v397 = vunpack.c.h.b16 %v100
    %v398 = vunpack.c.l.b16 %v101
    %v399 = vunpack.c.h.b16 %v101
    %v400 = vunpack.c.l.b16 %v102
    %v401 = vunpack.c.h.b16 %v102
    %v402 = vunpack.c.l.b16 %v103
    %v403 = vunpack.c.h.b16 %v103
    %v404 = vunpack.c.l.b16 %v104
    %v405 = vunpack.c.h.b16 %v104
    %v406 = vunpack.c.l.b16 %v105
    %v407 = vunpack.c.h.b16 %v105
    %v408 = vunpack.c.l.b16 %v106
    %v409 = vunpack.c.h.b16 %v106
    %v410 = vunpack.c.l.b16 %v107
    %v411 = vunpack.c.h.b16 %v107
    %v412 = vunpack.c.l.b16 %v108
    %v413 = vunpack.c.h.b16 %v108
    %v414 = vunpack.c.l.b16 %v109
    %v415 = vunpack.c.h.b16 %v109
    %v416 = vunpack.c.l.b16 %v110
    %v417 = vunpack.c.h.b16 %v110
    %v418 = vunpack.c.l.b16 %v111
    %v419 = vunpack.c.h.b16 %v111
    %v420 = vunpack.c.l.b16 %v112
    %v421 = vunpack.c.h.b16 %v112
    %v422 = vunpack.c.l.b16 %v113
    %v423 = vunpack.c.h.b16 %v113
    %v424 = vunpack.c.l.b16 %v114
    %v425 = vunpack.c.h.b16 %v114
    %v426 = vunpack.c.l.b16 %v115
    %v427 = vunpack.c.h.b16 %v115
    %v428 = vunpack.c.l.b16 %v116
    %v429 = vunpack.c.h.b16 %v116
    %v430 = vunpack.c.l.b16 %v117
    %v431 = vunpack.c.h.b16 %v117
    %v432 = vunpack.c.l.b16 %v118
    %v433 = vunpack.c.h.b16 %v118
    %v434 = vunpack.c.l.b16 %v119
    %v435 = vunpack.c.h.b16 %v119
    %v436 = vunpack.c.l.b16 %v120
    %v437 = vunpack.c.h.b16 %v120
    %v438 = vunpack.c.l.b16 %v121
    %v439 = vunpack.c.h.b16 %v121
    %v440 = vunpack.c.l.b16 %v122
    %v441 = vunpack.c.h.b16 %v122
    %v442 = vunpack.c.l.b16 %v123
    %v443 = vunpack.c.h.b16 %v123
    %v444 = vunpack.c.l.b16 %v124
    %v445 = vunpack.c.h.b16 %v124
    %v446 = vunpack.c.l.b16 %v125
    %v447 = vunpack.c.h.b16 %v125
    %v448 = vunpack.c.l.b16 %v126
    %v449 = vunpack.c.h.b16 %v126
    %v450 = vunpack.c.l.b16 %v127
    %v451 = vunpack.c.h.b16 %v127
    %v452 = vunpack.c.l.b16 %v128
    %v453 = vunpack.c.h.b16 %v128
    %v454 = vunpack.c.l.b16 %v129
    %v455 = vunpack.c.h.b16 %v129
    %v456 = vunpack.c.l.b16 %v130
    %v457 = vunpack.c.h.b16 %v130
    %v458 = vunpack.c.l.b16 %v131
    %v459 = vunpack.c.h.b16 %v131
    %v460 = vunpack.c.l.b16 %v132
    %v461 = vunpack.c.h.b16 %v132
    %v462 = vunpack.c.l.b16 %v133
    %v463 = vunpack.c.h.b16 %v133
    %v464 = vunpack.c.l.b16 %v134
    %v465 = vunpack.c.h.b16 %v134
    %v466 = vunpack.c.l.b16 %v135
    %v467 = vunpack.c.h.b16 %v135
    %v468 = vunpack.c.l.b16 %v136
    %v469 = vunpack.c.h.b16 %v136
    %v470 = vunpack.c.l.b16 %v137
    %v471 = vunpack.c.h.b16 %v137
    %v472 = vunpack.c.l.b16 %v138
    %v473 = vunpack.c.h.b16 %v138
    %v474 = vunpack.c.l.b16 %v139
    %v475 = vunpack.c.h.b16 %v139
    %v476 = vunpack.c.l.b16 %v140
    %v477 = vunpack.c.h.b16 %v140
    %v478 = vunpack.c.l.b16 %v141
    %v479 = vunpack.c.h.b16 %v141
    %v480 = vunpack.c.l.b16 %v142
    %v481 = vunpack.c.h.b16 %v142
    %v482 = vunpack.c.l.b16 %v143
    %v483 = vunpack.c.h.b16 %v143
    %v484 = vunpack.c.l.b16 %v144
    %v485 = vunpack.c.h.b16 %v144
    %v486 = vunpack.c.l.b16 %v145
    %v487 = vunpack.c.h.b16 %v145
    %v488 = vunpack.c.l.b16 %v146
    %v489 = vunpack.c.h.b16 %v146
    %v490 = vunpack.c.l.b16 %v147
    %v491 = vunpack.c.h.b16 %v147
    %v492 = vunpack.c.l.b16 %v148
    %v493 = vunpack.c.h.b16 %v148
    %v494 = vunpack.c.l.b16 %v149
    %v495 = vunpack.c.h.b16 %v149
    %v496 = vunpack.c.l.b16 %v150
    %v497 = vunpack.c.h.b16 %v150
    %v498 = vunpack.c.l.b16 %v151
    %v499 = vunpack.c.h.b16 %v151
    %v500 = vunpack.c.l.b16 %v152
    %v501 = vunpack.c.h.b16 %v152
    %v502 = vunpack.c.l.b16 %v153
    %v503 = vunpack.c.h.b16 %v153
    %v504 = vunpack.c.l.b16 %v154
    %v505 = vunpack.c.h.b16 %v154
    %v506 = vunpack.c.l.b16 %v155
    %v507 = vunpack.c.h.b16 %v155
    %v508 = vunpack.c.l.b16 %v156
    %v509 = vunpack.c.h.b16 %v156
    %v510 = vunpack.c.l.b16 %v157
    %v511 = vunpack.c.h.b16 %v157
    %v512 = vunpack.c.l.b16 %v158
    %v513 = vunpack.c.h.b16 %v158
    %v514 = vunpack.c.l.b16 %v159
    %v515 = vunpack.c.h.b16 %v159
    %v516 = vunpack.c.l.b16 %v160
    %v517 = vunpack.c.h.b16 %v160
    %v518 = vunpack.c.l.b16 %v161
    %v519 = vunpack.c.h.b16 %v161
    %v520 = vunpack.c.l.b16 %v162
    %v521 = vunpack.c.h.b16 %v162
    %v522 = vunpack.c.l.b16 %v163
    %v523 = vunpack.c.h.b16 %v163
    %v524 = vunpack.c.l.b16 %v164
    %v525 = vunpack.c.h.b16 %v164
    %v526 = vunpack.c.l.b16 %v165
    %v527 = vunpack.c.h.b16 %v165
    %v528 = vunpack.c.l.b16 %v166
    %v529 = vunpack.c.h.b16 %v166
    %v530 = vunpack.c.l.b16 %v167
    %v531 = vunpack.c.h.b16 %v167
    %v532 = vunpack.c.l.b16 %v168
    %v533 = vunpack.c.h.b16 %v168
    %v534 = vunpack.c.l.b16 %v169
    %v535 = vunpack.c.h.b16 %v169
    %v536 = vunpack.c.l.b16 %v170
    %v537 = vunpack.c.h.b16 %v170
    %v538 = vunpack.c.l.b16 %v171
    %v539 = vunpack.c.h.b16 %v171
    %v540 = vunpack.c.l.b16 %v172
    %v541 = vunpack.c.h.b16 %v172
    %v542 = vunpack.c.l.b16 %v173
    %v543 = vunpack.c.h.b16 %v173
    %v544 = vunpack.c.l.b16 %v174
    %v545 = vunpack.c.h.b16 %v174
    %v546 = vunpack.c.l.b16 %v175
    %v547 = vunpack.c.h.b16 %v175
    %v548 = vunpack.c.l.b16 %v176
    %v549 = vunpack.c.h.b16 %v176
    %v550 = vpack.c.b16 %v328, %v326
    %v551 = vpack.c.b16 %v329, %v327
    %v552 = vpack.c.b16 %v332, %v330
    %v553 = vpack.c.b16 %v333, %v331
    %v554 = vpack.c.b16 %v336, %v334
    %v555 = vpack.c.b16 %v337, %v335
    %v556 = vpack.c.b16 %v340, %v338
    %v557 = vpack.c.b16 %v341, %v339
    %v558 = vpack.c.b16 %v344, %v342
    %v559 = vpack.c.b16 %v345, %v343
    %v560 = vpack.c.b16 %v348, %v346
    %v561 = vpack.c.b16 %v349, %v347
    %v562 = vpack.c.b16 %v352, %v350
    %v563 = vpack.c.b16 %v353, %v351
    %v564 = vpack.c.b16 %v356, %v354
    %v565 = vpack.c.b16 %v357, %v355
    %v566 = vpack.c.b16 %v360, %v358
    %v567 = vpack.c.b16 %v361, %v359
    %v568 = vpack.c.b16 %v364, %v362
    %v569 = vpack.c.b16 %v365, %v363
    %v570 = vpack.c.b16 %v368, %v366
    %v571 = vpack.c.b16 %v369, %v367
    %v572 = vpack.c.b16 %v372, %v370
    %v573 = vpack.c.b16 %v373, %v371
    %v574 = vpack.c.b16 %v376, %v374
    %v575 = vpack.c.b16 %v377, %v375
    %v576 = vpack.c.b16 %v380, %v378
    %v577 = vpack.c.b16 %v381, %v379
    %v578 = vpack.c.b16 %v384, %v382
    %v579 = vpack.c.b16 %v385, %v383
    %v580 = vpack.c.b16 %v388, %v386
    %v581 = vpack.c.b16 %v389, %v387
    %v582 = vpack.c.b16 %v392, %v390
    %v583 = vpack.c.b16 %v393, %v391
    %v584 = vpack.c.b16 %v396, %v394
    %v585 = vpack.c.b16 %v397, %v395
    %v586 = vpack.c.b16 %v400, %v398
    %v587 = vpack.c.b16 %v401, %v399
    %v588 = vpack.c.b16 %v404, %v402
    %v589 = vpack.c.b16 %v405, %v403
    %v590 = vpack.c.b16 %v408, %v406
    %v591 = vpack.c.b16 %v409, %v407
    %v592 = vpack.c.b16 %v412, %v410
    %v593 = vpack.c.b16 %v413, %v411
    %v594 = vpack.c.b16 %v416, %v414
    %v595 = vpack.c.b16 %v417, %v415
    %v596 = vpack.c.b16 %v420, %v418
    %v597 = vpack.c.b16 %v421, %v419
    %v598 = vpack.c.b16 %v424, %v422
    %v599 = vpack.c.b16 %v425, %v423
    %v600 = vpack.c.b16 %v428, %v426
    %v601 = vpack.c.b16 %v429, %v427
    %v602 = vpack.c.b16 %v432, %v430
    %v603 = vpack.c.b16 %v433, %v431
    %v604 = vpack.c.b16 %v436, %v434
    %v605 = vpack.c.b16 %v437, %v435
    %v606 = vpack.c.b16 %v440, %v438
    %v607 = vpack.c.b16 %v441, %v439
    %v608 = vpack.c.b16 %v444, %v442
    %v609 = vpack.c.b16 %v445, %v443
    %v610 = vpack.c.b16 %v448, %v446
    %v611 = vpack.c.b16 %v449, %v447
    %v612 = vpack.c.b16 %v452, %v450
    %v613 = vpack.c.b16 %v453, %v451
    %v614 = vpack.c.b16 %v456, %v454
    %v615 = vpack.c.b16 %v457, %v455
    %v616 = vpack.c.b16 %v460, %v458
    %v617 = vpack.c.b16 %v461, %v459
    %v618 = vpack.c.b16 %v464, %v462
    %v619 = vpack.c.b16 %v465, %v463
    %v620 = vpack.c.b16 %v468, %v466
    %v621 = vpack.c.b16 %v469, %v467
    %v622 = vpack.c.b16 %v472, %v470
    %v623 = vpack.c.b16 %v473, %v471
    %v624 = vpack.c.b16 %v476, %v474
    %v625 = vpack.c.b16 %v477, %v475
    %v626 = vpack.c.b16 %v480, %v478
    %v627 = vpack.c.b16 %v481, %v479
    %v628 = vpack.c.b16 %v484, %v482
    %v629 = vpack.c.b16 %v485, %v483
    %v630 = vpack.c.b16 %v488, %v486
    %v631 = vpack.c.b16 %v489, %v487
    %v632 = vpack.c.b16 %v492, %v490
    %v633 = vpack.c.b16 %v493, %v491
    %v634 = vpack.c.b16 %v496, %v494
    %v635 = vpack.c.b16 %v497, %v495
    %v636 = vpack.c.b16 %v500, %v498
    %v637 = vpack.c.b16 %v501, %v499
    %v638 = vpack.c.b16 %v504, %v502
    %v639 = vpack.c.b16 %v505, %v503
    %v640 = vpack.c.b16 %v508, %v506
    %v641 = vpack.c.b16 %v509, %v507
    %v642 = vpack.c.b16 %v512, %v510
    %v643 = vpack.c.b16 %v513, %v511
    %v644 = vpack.c.b16 %v516, %v514
    %v645 = vpack.c.b16 %v517, %v515
    %v646 = vpack.c.b16 %v520, %v518
    %v647 = vpack.c.b16 %v521, %v519
    %v648 = vpack.c.b16 %v524, %v522
    %v649 = vpack.c.b16 %v525, %v523
    %v650 = vpack.c.b16 %v528, %v526
    %v651 = vpack.c.b16 %v529, %v527
    %v652 = vpack.c.b16 %v532, %v530
    %v653 = vpack.c.b16 %v533, %v531
    %v654 = vpack.c.b16 %v536, %v534
    %v655 = vpack.c.b16 %v537, %v535
    %v656 = vpack.c.b16 %v540, %v538
    %v657 = vpack.c.b16 %v541, %v539
    %v658 = vpack.c.b16 %v544, %v542
    %v659 = vpack.c.b16 %v545, %v543
    %v660 = vpack.c.b16 %v548, %v546
    %v661 = vpack.c.b16 %v549, %v547
    %774 = vmatprep.subr.bf16.mxu0 %v551
    %775 = vmatpush1.bf16.msra.mxu0 %v550
    %776 = vmatprep.subr.bf16.mxu0 %v553
    %777 = vmatpush1.bf16.msra.mxu0 %v552
    %778 = vmatprep.subr.bf16.mxu0 %v555
    %779 = vmatpush1.bf16.msra.mxu0 %v554
    %780 = vmatprep.subr.bf16.mxu0 %v557
    %781 = vmatpush1.bf16.msra.mxu0 %v556
    %782 = vmatprep.subr.bf16.mxu0 %v559
    %783 = vmatpush1.bf16.msra.mxu0 %v558
    %784 = vmatprep.subr.bf16.mxu0 %v561
    %785 = vmatpush1.bf16.msra.mxu0 %v560
    %786 = vmatprep.subr.bf16.mxu0 %v563
    %787 = vmatpush1.bf16.msra.mxu0 %v562
    %788 = vmatprep.subr.bf16.mxu0 %v565
    %789 = vmatpush1.bf16.msra.mxu0 %v564
    %790 = vmatprep.subr.bf16.mxu0 %v567
    %791 = vmatpush1.bf16.msra.mxu0 %v566
    %792 = vmatprep.subr.bf16.mxu0 %v569
    %793 = vmatpush1.bf16.msra.mxu0 %v568
    %794 = vmatprep.subr.bf16.mxu0 %v571
    %795 = vmatpush1.bf16.msra.mxu0 %v570
    %796 = vmatprep.subr.bf16.mxu0 %v573
    %797 = vmatpush1.bf16.msra.mxu0 %v572
    %798 = vmatprep.subr.bf16.mxu0 %v575
    %799 = vmatpush1.bf16.msra.mxu0 %v574
    %800 = vmatprep.subr.bf16.mxu0 %v577
    %801 = vmatpush1.bf16.msra.mxu0 %v576
    %802 = vmatprep.subr.bf16.mxu0 %v579
    %803 = vmatpush1.bf16.msra.mxu0 %v578
    %804 = vmatprep.subr.bf16.mxu0 %v581
    %805 = vmatpush1.bf16.msra.mxu0 %v580
    %806 = vmatprep.mubr.bf16.mxu0 %v201
    %807 = vmatmul.mubr.bf16.gmra.mrb[0].mxu0 %v200
    %v808 = vpop.f32.mrb[0].mxu0
    %v809 = vadd.f32 %v182, %v808
    %v810 = vpop.f32.mrb[0].mxu0
    %v811 = vadd.f32 %v186, %v810
    %v812 = vpop.f32.mrb[0].mxu0
    %v813 = vpop.f32.mrb[0].mxu0
    %814 = vdwg.mxu0
    %815 = vmatprep.subr.bf16.mxu0 %v583
    %816 = vmatpush1.bf16.msra.mxu0 %v582
    %817 = vmatprep.subr.bf16.mxu0 %v585
    %818 = vmatpush1.bf16.msra.mxu0 %v584
    %819 = vmatprep.subr.bf16.mxu0 %v587
    %820 = vmatpush1.bf16.msra.mxu0 %v586
    %821 = vmatprep.subr.bf16.mxu0 %v589
    %822 = vmatpush1.bf16.msra.mxu0 %v588
    %823 = vmatprep.subr.bf16.mxu0 %v591
    %824 = vmatpush1.bf16.msra.mxu0 %v590
    %825 = vmatprep.subr.bf16.mxu0 %v593
    %826 = vmatpush1.bf16.msra.mxu0 %v592
    %827 = vmatprep.subr.bf16.mxu0 %v595
    %828 = vmatpush1.bf16.msra.mxu0 %v594
    %829 = vmatprep.subr.bf16.mxu0 %v597
    %830 = vmatpush1.bf16.msra.mxu0 %v596
    %831 = vmatprep.subr.bf16.mxu0 %v599
    %832 = vmatpush1.bf16.msra.mxu0 %v598
    %833 = vmatprep.subr.bf16.mxu0 %v601
    %834 = vmatpush1.bf16.msra.mxu0 %v600
    %835 = vmatprep.subr.bf16.mxu0 %v603
    %836 = vmatpush1.bf16.msra.mxu0 %v602
    %837 = vmatprep.subr.bf16.mxu0 %v605
    %838 = vmatpush1.bf16.msra.mxu0 %v604
    %839 = vmatprep.subr.bf16.mxu0 %v607
    %840 = vmatpush1.bf16.msra.mxu0 %v606
    %841 = vmatprep.subr.bf16.mxu0 %v609
    %842 = vmatpush1.bf16.msra.mxu0 %v608
    %843 = vmatprep.subr.bf16.mxu0 %v611
    %844 = vmatpush1.bf16.msra.mxu0 %v610
    %845 = vmatprep.subr.bf16.mxu0 %v613
    %846 = vmatpush1.bf16.msra.mxu0 %v612
    %847 = vmatprep.mubr.bf16.mxu0 %v203
    %848 = vmatmul.mubr.bf16.gmra.mrb[0].mxu0 %v202
    %v849 = vpop.f32.mrb[0].mxu0
    %v850 = vadd.f32 %v809, %v849
    %v851 = vpop.f32.mrb[0].mxu0
    %v852 = vadd.f32 %v811, %v851
    %v853 = vpop.f32.mrb[0].mxu0
    %v854 = vpop.f32.mrb[0].mxu0
    %855 = vdwg.mxu0
    %856 = vmatprep.subr.bf16.mxu0 %v615
    %857 = vmatpush1.bf16.msra.mxu0 %v614
    %858 = vmatprep.subr.bf16.mxu0 %v617
    %859 = vmatpush1.bf16.msra.mxu0 %v616
    %860 = vmatprep.subr.bf16.mxu0 %v619
    %861 = vmatpush1.bf16.msra.mxu0 %v618
    %862 = vmatprep.subr.bf16.mxu0 %v621
    %863 = vmatpush1.bf16.msra.mxu0 %v620
    %864 = vmatprep.subr.bf16.mxu0 %v623
    %865 = vmatpush1.bf16.msra.mxu0 %v622
    %866 = vmatprep.subr.bf16.mxu0 %v625
    %867 = vmatpush1.bf16.msra.mxu0 %v624
    %868 = vmatprep.subr.bf16.mxu0 %v627
    %869 = vmatpush1.bf16.msra.mxu0 %v626
    %870 = vmatprep.subr.bf16.mxu0 %v629
    %871 = vmatpush1.bf16.msra.mxu0 %v628
    %872 = vmatprep.subr.bf16.mxu0 %v631
    %873 = vmatpush1.bf16.msra.mxu0 %v630
    %874 = vmatprep.subr.bf16.mxu0 %v633
    %875 = vmatpush1.bf16.msra.mxu0 %v632
    %876 = vmatprep.subr.bf16.mxu0 %v635
    %877 = vmatpush1.bf16.msra.mxu0 %v634
    %878 = vmatprep.subr.bf16.mxu0 %v637
    %879 = vmatpush1.bf16.msra.mxu0 %v636
    %880 = vmatprep.subr.bf16.mxu0 %v639
    %881 = vmatpush1.bf16.msra.mxu0 %v638
    %882 = vmatprep.subr.bf16.mxu0 %v641
    %883 = vmatpush1.bf16.msra.mxu0 %v640
    %884 = vmatprep.subr.bf16.mxu0 %v643
    %885 = vmatpush1.bf16.msra.mxu0 %v642
    %886 = vmatprep.subr.bf16.mxu0 %v645
    %887 = vmatpush1.bf16.msra.mxu0 %v644
    %888 = vmatprep.mubr.bf16.mxu0 %v205
    %889 = vmatmul.mubr.bf16.gmra.mrb[0].mxu0 %v204
    %v890 = vpop.f32.mrb[0].mxu0
    %v891 = vadd.f32 %v850, %v890
    %v892 = vpop.f32.mrb[0].mxu0
    %v893 = vadd.f32 %v852, %v892
    %v894 = vpop.f32.mrb[0].mxu0
    %v895 = vpop.f32.mrb[0].mxu0
    %896 = vdwg.mxu0
    %897 = vmatprep.subr.bf16.mxu0 %v647
    %898 = vmatpush1.bf16.msra.mxu0 %v646
    %899 = vmatprep.subr.bf16.mxu0 %v649
    %900 = vmatpush1.bf16.msra.mxu0 %v648
    %901 = vmatprep.subr.bf16.mxu0 %v651
    %902 = vmatpush1.bf16.msra.mxu0 %v650
    %903 = vmatprep.subr.bf16.mxu0 %v653
    %904 = vmatpush1.bf16.msra.mxu0 %v652
    %905 = vmatprep.subr.bf16.mxu0 %v655
    %906 = vmatpush1.bf16.msra.mxu0 %v654
    %907 = vmatprep.subr.bf16.mxu0 %v657
    %908 = vmatpush1.bf16.msra.mxu0 %v656
    %909 = vmatprep.subr.bf16.mxu0 %v659
    %910 = vmatpush1.bf16.msra.mxu0 %v658
    %911 = vmatprep.subr.bf16.mxu0 %v661
    %912 = vmatpush1.bf16.msra.mxu0 %v660
    %913 = vmatprep.subr.bf16.mxu0 0
    %914 = vmatpush1.bf16.msra.mxu0 0
    %915 = vmatprep.subr.bf16.mxu0 0
    %916 = vmatpush1.bf16.msra.mxu0 0
    %917 = vmatprep.subr.bf16.mxu0 0
    %918 = vmatpush1.bf16.msra.mxu0 0
    %919 = vmatprep.subr.bf16.mxu0 0
    %920 = vmatpush1.bf16.msra.mxu0 0
    %921 = vmatprep.subr.bf16.mxu0 0
    %922 = vmatpush1.bf16.msra.mxu0 0
    %923 = vmatprep.subr.bf16.mxu0 0
    %924 = vmatpush1.bf16.msra.mxu0 0
    %925 = vmatprep.subr.bf16.mxu0 0
    %926 = vmatpush1.bf16.msra.mxu0 0
    %927 = vmatprep.subr.bf16.mxu0 0
    %928 = vmatpush1.bf16.msra.mxu0 0
    %929 = vmatprep.mubr.bf16.mxu0 0
    %930 = vmatmul.mubr.bf16.gmra.mrb[0].mxu0 %v206
    %v931 = vpop.f32.mrb[0].mxu0
    %v932 = vadd.f32 %v891, %v931
    %v933 = vpop.f32.mrb[0].mxu0
    %v934 = vadd.f32 %v893, %v933
    %v935 = vpop.f32.mrb[0].mxu0
    %v936 = vpop.f32.mrb[0].mxu0
    %937 = vdwg.mxu0
    %v938 = vmax.f32 %v932, 0.0
    %v939 = vmax.f32 %v934, 0.0
    %v940 = vpack.c.bf16 %v938, %v938
    %v941 = vpack.c.bf16 %v939, %v939
    %v942 = vld [vmem:[#allocation7] sm:$0xf]
    %v943 = vld [vmem:[#allocation7 + $0x4] sm:$0xf]
    %v944 = vld [vmem:[#allocation7 + $0x8] sm:$0xf]
    %v945 = vld [vmem:[#allocation7 + $0xc] sm:$0xf]
    %v946 = vld [vmem:[#allocation7 + $0x10] sm:$0xf]
    %v947 = vld [vmem:[#allocation7 + $0x14] sm:$0xf]
    %v948 = vld [vmem:[#allocation7 + $0x18] sm:$0xf]
    %v949 = vld [vmem:[#allocation7 + $0x1c] sm:$0xf]
    %v950 = vld [vmem:[#allocation7 + $0x20] sm:$0xf]
    %v951 = vld [vmem:[#allocation7 + $0x24] sm:$0xf]
    %v952 = vld [vmem:[#allocation7 + $0x28] sm:$0xf]
    %v953 = vld [vmem:[#allocation7 + $0x2c] sm:$0xf]
    %v954 = vld [vmem:[#allocation7 + $0x30] sm:$0xf]
    %v955 = vld [vmem:[#allocation7 + $0x34] sm:$0xf]
    %v956 = vld [vmem:[#allocation7 + $0x38] sm:$0xf]
    %v957 = vld [vmem:[#allocation7 + $0x3c] sm:$0xf]
    %v958 = vld [vmem:[#allocation7 + $0x40] sm:$0xf]
    %v959 = vld [vmem:[#allocation7 + $0x44] sm:$0xf]
    %v960 = vld [vmem:[#allocation7 + $0x48] sm:$0xf]
    %v961 = vld [vmem:[#allocation7 + $0x4c] sm:$0xf]
    %v962 = vld [vmem:[#allocation7 + $0x50] sm:$0xf]
    %v963 = vld [vmem:[#allocation7 + $0x54] sm:$0xf]
    %v964 = vld [vmem:[#allocation7 + $0x58] sm:$0xf]
    %v965 = vld [vmem:[#allocation7 + $0x5c] sm:$0xf]
    %v966 = vld [vmem:[#allocation7 + $0x60] sm:$0xf]
    %v967 = vld [vmem:[#allocation7 + $0x64] sm:$0xf]
    %v968 = vld [vmem:[#allocation7 + $0x68] sm:$0xf]
    %v969 = vld [vmem:[#allocation7 + $0x6c] sm:$0xf]
    %v970 = vld [vmem:[#allocation7 + $0x70] sm:$0xf]
    %v971 = vld [vmem:[#allocation7 + $0x74] sm:$0xf]
    %v972 = vld [vmem:[#allocation7 + $0x78] sm:$0xf]
    %v973 = vld [vmem:[#allocation7 + $0x7c] sm:$0xf]
    %v974 = vld [vmem:[%s4] sm:$0x1]
    %v976 = vlaneseq
    %v977 = vshrl.u32 %v976, 7
    %v978 = vsub.s32 0, %v977
    %v979 = vrot.slane %v974, %v978
    %v1013 = vunpack.c.l.b16 %v942
    %v1014 = vunpack.c.l.b16 %v943
    %v1015 = vunpack.c.l.b16 %v944
    %v1016 = vunpack.c.l.b16 %v945
    %v1017 = vunpack.c.l.b16 %v946
    %v1018 = vunpack.c.l.b16 %v947
    %v1019 = vunpack.c.l.b16 %v948
    %v1020 = vunpack.c.l.b16 %v949
    %v1021 = vunpack.c.l.b16 %v950
    %v1022 = vunpack.c.l.b16 %v951
    %v1023 = vunpack.c.l.b16 %v952
    %v1024 = vunpack.c.l.b16 %v953
    %v1025 = vunpack.c.l.b16 %v954
    %v1026 = vunpack.c.l.b16 %v955
    %v1027 = vunpack.c.l.b16 %v956
    %v1028 = vunpack.c.l.b16 %v957
    %v1029 = vunpack.c.l.b16 %v958
    %v1030 = vunpack.c.l.b16 %v959
    %v1031 = vunpack.c.l.b16 %v960
    %v1032 = vunpack.c.l.b16 %v961
    %v1033 = vunpack.c.l.b16 %v962
    %v1034 = vunpack.c.l.b16 %v963
    %v1035 = vunpack.c.l.b16 %v964
    %v1036 = vunpack.c.l.b16 %v965
    %v1037 = vunpack.c.l.b16 %v966
    %v1038 = vunpack.c.l.b16 %v967
    %v1039 = vunpack.c.l.b16 %v968
    %v1040 = vunpack.c.l.b16 %v969
    %v1041 = vunpack.c.l.b16 %v970
    %v1042 = vunpack.c.l.b16 %v971
    %v1043 = vunpack.c.l.b16 %v972
    %v1044 = vunpack.c.l.b16 %v973
    %v1045 = vpack.c.b16 %v1014, %v1013
    %v1046 = vpack.c.b16 %v1016, %v1015
    %v1047 = vpack.c.b16 %v1018, %v1017
    %v1048 = vpack.c.b16 %v1020, %v1019
    %v1049 = vpack.c.b16 %v1022, %v1021
    %v1050 = vpack.c.b16 %v1024, %v1023
    %v1051 = vpack.c.b16 %v1026, %v1025
    %v1052 = vpack.c.b16 %v1028, %v1027
    %v1053 = vpack.c.b16 %v1030, %v1029
    %v1054 = vpack.c.b16 %v1032, %v1031
    %v1055 = vpack.c.b16 %v1034, %v1033
    %v1056 = vpack.c.b16 %v1036, %v1035
    %v1057 = vpack.c.b16 %v1038, %v1037
    %v1058 = vpack.c.b16 %v1040, %v1039
    %v1059 = vpack.c.b16 %v1042, %v1041
    %v1060 = vpack.c.b16 %v1044, %v1043
    %1077 = vmatprep.subr.bf16.mxu0 0
    %1078 = vmatpush1.bf16.msra.mxu0 %v1045
    %1079 = vmatprep.subr.bf16.mxu0 0
    %1080 = vmatpush1.bf16.msra.mxu0 %v1046
    %1081 = vmatprep.subr.bf16.mxu0 0
    %1082 = vmatpush1.bf16.msra.mxu0 %v1047
    %1083 = vmatprep.subr.bf16.mxu0 0
    %1084 = vmatpush1.bf16.msra.mxu0 %v1048
    %1085 = vmatprep.subr.bf16.mxu0 0
    %1086 = vmatpush1.bf16.msra.mxu0 %v1049
    %1087 = vmatprep.subr.bf16.mxu0 0
    %1088 = vmatpush1.bf16.msra.mxu0 %v1050
    %1089 = vmatprep.subr.bf16.mxu0 0
    %1090 = vmatpush1.bf16.msra.mxu0 %v1051
    %1091 = vmatprep.subr.bf16.mxu0 0
    %1092 = vmatpush1.bf16.msra.mxu0 %v1052
    %1093 = vmatprep.subr.bf16.mxu0 0
    %1094 = vmatpush1.bf16.msra.mxu0 %v1053
    %1095 = vmatprep.subr.bf16.mxu0 0
    %1096 = vmatpush1.bf16.msra.mxu0 %v1054
    %1097 = vmatprep.subr.bf16.mxu0 0
    %1098 = vmatpush1.bf16.msra.mxu0 %v1055
    %1099 = vmatprep.subr.bf16.mxu0 0
    %1100 = vmatpush1.bf16.msra.mxu0 %v1056
    %1101 = vmatprep.subr.bf16.mxu0 0
    %1102 = vmatpush1.bf16.msra.mxu0 %v1057
    %1103 = vmatprep.subr.bf16.mxu0 0
    %1104 = vmatpush1.bf16.msra.mxu0 %v1058
    %1105 = vmatprep.subr.bf16.mxu0 0
    %1106 = vmatpush1.bf16.msra.mxu0 %v1059
    %1107 = vmatprep.subr.bf16.mxu0 0
    %1108 = vmatpush1.bf16.msra.mxu0 %v1060
    %1109 = vmatprep.mubr.bf16.mxu0 %v941
    %1110 = vmatmul.mubr.bf16.gmra.mrb[0].mxu0 %v940
    %v1111 = vpop.f32.mrb[0].mxu0
    %v1112 = vadd.f32 %v979, %v1111
    %v1113 = vpop.f32.mrb[0].mxu0
    %v1114 = vpop.f32.mrb[0].mxu0
    %v1115 = vpop.f32.mrb[0].mxu0
    %1116 = vdwg.mxu0
    %1117 = vmax.xlane.f32.xlu0 %v1112
    %v1118 = vpop.xlane.xlu0 %1117
    %v1119 = vsub.f32 %v1112, %v1118
    %v1120 = vmul.f32 %v1119, 1.442695
    %v1121 = vpow.pop %v1120
    %1122 = vadd.xlane.f32.xlu0 %v1121
    %v1123 = vpop.xlane.xlu0 %1122
    %v1124 = vlog2.pop %v1123
    %v1125 = vmul.f32 %v1124, 0.6931472
    %v1126 = vsub.f32 %v1119, %v1125
    %1127 = vst [vmem:[#allocation8] sm:$0xff] %v1126
    // Predicated region
    $region34: #{tpu_custom_call.1} parent=1 // pred_check
      _
    $region35: #{tpu_custom_call.1} parent=1 // pred_check_branch
      %1129 = sbr.rel (0) target = $region37
    $region36: #{tpu_custom_call.1} parent=1 // pred_region
      %s1131 = ssub.s32 128, 128
      %1132 = vsyncadd [#allocation4], %s1131
      %s1134 = sshll.u32 [#allocation8], 4
      %s1135 = int_to_ptr.vmem [resolvable:$true] %s1134
      %1137 = dma.vmem_to_hbm [thread:$0]  %s1135, 128, %s5, [#allocation4]
    $region37: #{tpu_custom_call.1} parent=1 // pred_fallthru
      _
    // Predicated region
    $region38: #{tpu_custom_call.1} parent=1 // pred_check
      _
    $region39: #{tpu_custom_call.1} parent=1 // pred_check_branch
      %1139 = sbr.rel (0) target = $region41
    $region40: #{tpu_custom_call.1} parent=1 // pred_region
      %1140 = dma.done [#allocation4], 128
    $region41: #{tpu_custom_call.1} parent=1 // pred_fallthru
      _
    %1141 = vsyncpa [#allocation3], 1
    %1142 = vsyncpa [#allocation6], 1
    %1143 = vsyncpa [#allocation4], 1

</llo_original>
